<compile_context>
chip_gen: v7x
topology: tpu7x:2x2x1
jax: 0.10.0
libtpu: 0.0.40
codegen_flags: <defaults>
</compile_context>

<pallas_src>
import functools

import numpy as np

import jax
import jax.numpy as jnp
from jax.experimental import pallas as pl
from jax.experimental.pallas import tpu as pltpu


def _build_pool_matrix(h, w, h_out, w_out, stride, pool_k, dtype):
    """(H*W, Ho*Wo) matrix P such that x_flat @ P == avg_pool2d(x, pool_k, stride)."""
    p = np.zeros((h * w, h_out * w_out), dtype=np.float32)
    scale = 1.0 / float(pool_k * pool_k)
    for i in range(h_out):
        for j in range(w_out):
            col = i * w_out + j
            for di in range(pool_k):
                for dj in range(pool_k):
                    row = (i * stride + di) * w + (j * stride + dj)
                    p[row, col] = scale
    return jnp.asarray(p, dtype=dtype)


def _make_kernel(nb, in_c, out_c, hw_out, out_dtype, precision):
    pad_c = out_c - in_c

    def kernel(x_ref, p_ref, o_ref):
        # x_ref: (nb, in_c, H*W)   p_ref: (H*W, Ho*Wo)   o_ref: (nb, out_c, Ho*Wo)
        p = p_ref[...]
        for s in range(nb):  # nb is small and static
            pooled = jnp.dot(
                x_ref[s], p,
                precision=precision,
                preferred_element_type=jnp.float32,
            )  # (in_c, Ho*Wo)
            o_ref[s, pl.ds(0, in_c), :] = pooled.astype(out_dtype)
        if pad_c > 0:
            o_ref[:, pl.ds(in_c, pad_c), :] = jnp.zeros(
                (nb, pad_c, hw_out), dtype=out_dtype)

    return kernel


@functools.partial(jax.jit, static_argnames=("stride", "out_c"))
def avg_pool_shortcut(x, *, stride, out_c):
    """Pallas implementation of AvgPoolShortCut.forward. x: (N, in_c, H, W)."""
    n, in_c, h, w = x.shape
    assert out_c >= in_c, "out_c must be >= in_c"

    pool_k = 1 if (h % 2 != 0) else stride
    h_out = (h - pool_k) // stride + 1
    w_out = (w - pool_k) // stride + 1
    hw_in = h * w
    hw_out = h_out * w_out

    # --- batch blocking: ~1 MiB input tile, divisor of N, keep grid >= 2 ----
    per_sample_bytes = in_c * hw_in * x.dtype.itemsize
    nb_cap = max(1, (1 << 20) // per_sample_bytes)
    if n >= 2:
        nb_cap = min(nb_cap, n // 2)      # >= 2 grid steps so v7x uses both TCs
    nb = 1
    for d in range(1, n + 1):
        if n % d == 0 and d <= nb_cap:
            nb = d
    grid = (n // nb,)

    # f32 inputs: force full-precision MXU passes so results track the f32
    # reference closely; bf16 inputs stay in native bf16 on the MXU (v6e/v7x).
    if x.dtype == jnp.float32:
        p_dtype, precision = jnp.float32, jax.lax.Precision.HIGHEST
    else:
        p_dtype, precision = x.dtype, None
    pool_mat = _build_pool_matrix(h, w, h_out, w_out, stride, pool_k, p_dtype)

    kernel = _make_kernel(nb, in_c, out_c, hw_out, x.dtype, precision)

    x_flat = x.reshape(n, in_c, hw_in)    # free: contiguous trailing dims
    out_flat = pl.pallas_call(
        kernel,
        out_shape=jax.ShapeDtypeStruct((n, out_c, hw_out), x.dtype),
        grid=grid,
        in_specs=[
            pl.BlockSpec((nb, in_c, hw_in), lambda b: (b, 0, 0)),
            # same block index every step -> pooling matrix stays resident
            pl.BlockSpec((hw_in, hw_out), lambda b: (0, 0)),
        ],
        out_specs=pl.BlockSpec((nb, out_c, hw_out), lambda b: (b, 0, 0)),
        compiler_params=pltpu.CompilerParams(
            dimension_semantics=("parallel",)),
    )(x_flat, pool_mat)
    return out_flat.reshape(n, out_c, h_out, w_out)


def _reference(x, stride, out_c):
    """Pure-JAX reference mirroring the PyTorch module."""
    n, in_c, h, w = x.shape
    pool_k = 1 if (h % 2 != 0) else stride
    h_out = (h - pool_k) // stride + 1
    w_out = (w - pool_k) // stride + 1
    if pool_k == 1:
        pooled = x[:, :, ::stride, ::stride][:, :, :h_out, :w_out]
    else:
        acc = jnp.zeros((n, in_c, h_out, w_out), jnp.float32)
        for di in range(pool_k):
            for dj in range(pool_k):
                acc = acc + x[:, :, di::stride, dj::stride][:, :, :h_out, :w_out]
        pooled = (acc / float(pool_k * pool_k)).astype(x.dtype)
    pad = jnp.zeros((n, out_c - in_c, h_out, w_out), x.dtype)
    return jnp.concatenate([pooled, pad], axis=1)


if __name__ == "__main__":
    # Module config (no learnable parameters in AvgPoolShortCut).
    stride, in_c, out_c = 2, 4, 8
    n, h, w = 2, 16, 16  # even H -> kernel=stride path

    key = jax.random.PRNGKey(0)
    x = jax.random.normal(key, (n, in_c, h, w), dtype=jnp.float32)

    out = jax.block_until_ready(avg_pool_shortcut(x, stride=stride, out_c=out_c))
    ref = _reference(x, stride, out_c)
    assert out.shape == (n, out_c, h // stride, w // stride), out.shape
    assert jnp.allclose(out, ref, atol=1e-5, rtol=1e-5), "mismatch vs reference"

    # Also exercise the odd-H branch (kernel=1 subsampling).
    x_odd = jax.random.normal(jax.random.PRNGKey(1), (n, in_c, 15, 15), jnp.float32)
    out_odd = jax.block_until_ready(
        avg_pool_shortcut(x_odd, stride=stride, out_c=out_c))
    ref_odd = _reference(x_odd, stride, out_c)
    assert out_odd.shape == ref_odd.shape, out_odd.shape
    assert jnp.allclose(out_odd, ref_odd, atol=1e-5, rtol=1e-5), "mismatch (odd H)"

    print("KERNEL_OK")
</pallas_src>

<mosaic_0001>
module attributes {stable_mosaic.version = 11 : i64} {
  func.func @kernel(%arg0: i32, %arg1: memref<1x4x256xf32, #tpu.memory_space<vmem>>, %arg2: memref<256x64xf32, #tpu.memory_space<vmem>>, %arg3: memref<1x8x64xf32, #tpu.memory_space<vmem>>) attributes {dimension_semantics = [#tpu.dimension_semantics<parallel>], iteration_bounds = array<i64: 2>, scalar_prefetch = 0 : i64, scratch_operands = 0 : i64, tpu.core_type = #tpu.core_type<tc>, window_params = [{transform_indices = @transform_0, window_bounds = array<i64: 1, 4, 256>}, {pipeline_mode = #tpu.pipeline_mode<synchronous>, transform_indices = @transform_1, window_bounds = array<i64: 256, 64>}, {transform_indices = @transform_2, window_bounds = array<i64: 1, 8, 64>}]} {
    %c0 = arith.constant 0 : index
    %c0_0 = arith.constant 0 : index
    %0 = vector.load %arg2[%c0, %c0_0] : memref<256x64xf32, #tpu.memory_space<vmem>>, vector<256x64xf32>
    %c0_1 = arith.constant 0 : index
    %c0_2 = arith.constant 0 : index
    %c0_3 = arith.constant 0 : index
    %1 = vector.load %arg1[%c0_1, %c0_2, %c0_3] : memref<1x4x256xf32, #tpu.memory_space<vmem>>, vector<1x4x256xf32>
    %2 = vector.shape_cast %1 : vector<1x4x256xf32> to vector<4x256xf32>
    %cst = arith.constant dense<0.000000e+00> : vector<4x64xf32>
    %3 = tpu.matmul %2, %0, %cst {dimension_numbers = #tpu.dot_dimension_numbers<[1], [0], [0], [1], [0, 0, 1, 1], [], []>, precision = #tpu.contract_precision<fp32>} : vector<4x256xf32>, vector<256x64xf32>, vector<4x64xf32> -> vector<4x64xf32>
    %c0_4 = arith.constant 0 : index
    %c0_5 = arith.constant 0 : index
    %c0_6 = arith.constant 0 : index
    %4 = vector.load %arg3[%c0_4, %c0_5, %c0_6] : memref<1x8x64xf32, #tpu.memory_space<vmem>>, vector<1x4x64xf32>
    %5 = vector.shape_cast %4 : vector<1x4x64xf32> to vector<4x64xf32>
    %6 = vector.shape_cast %3 : vector<4x64xf32> to vector<1x4x64xf32>
    tpu.vector_store %arg3[%c0_4, %c0_5, %c0_6], %6 {strides = array<i32>} : memref<1x8x64xf32, #tpu.memory_space<vmem>>, vector<1x4x64xf32>,
    %cst_7 = arith.constant 0.000000e+00 : f32
    %7 = vector.broadcast %cst_7 : f32 to vector<1x4x64xf32>
    %c0_8 = arith.constant 0 : index
    %c4 = arith.constant 4 : index
    %c0_9 = arith.constant 0 : index
    %8 = vector.load %arg3[%c0_8, %c4, %c0_9] : memref<1x8x64xf32, #tpu.memory_space<vmem>>, vector<1x4x64xf32>
    tpu.vector_store %arg3[%c0_8, %c4, %c0_9], %7 {strides = array<i32>} : memref<1x8x64xf32, #tpu.memory_space<vmem>>, vector<1x4x64xf32>,
    return
  }
  func.func @transform_0(%arg0: i32) -> (i32, i32, i32) {
    %c0_i32 = arith.constant 0 : i32
    %c0_i32_0 = arith.constant 0 : i32
    %c0_i32_1 = arith.constant 0 : i32
    return %arg0, %c0_i32, %c0_i32_0 : i32, i32, i32
  }
  func.func @transform_1(%arg0: i32) -> (i32, i32) {
    %c0_i32 = arith.constant 0 : i32
    %c0_i32_0 = arith.constant 0 : i32
    %c0_i32_1 = arith.constant 0 : i32
    return %c0_i32, %c0_i32_0 : i32, i32
  }
  func.func @transform_2(%arg0: i32) -> (i32, i32, i32) {
    %c0_i32 = arith.constant 0 : i32
    %c0_i32_0 = arith.constant 0 : i32
    %c0_i32_1 = arith.constant 0 : i32
    return %arg0, %c0_i32, %c0_i32_0 : i32, i32, i32
  }
}

</mosaic_0001>

<llo_original>
// kernel: avg_pool_shortcut.1
$region0: #{avg_pool_shortcut.1}
  #allocation0 [shape = 'u32[]', space=smem, size = 0x4, offset = 0x4, fixed_abs, tag = 'smem constant byte address 0x4 - core index']
  #allocation1 [shape = 'u32[144,128]{1,0:T(1,128)}', space=vmem, size = 0x12000, scoped, tag = 'internal scratch']
  %s0 = inlined_call_operand.vmem [shape: f32[2,4,256], index: 0, kind: input, shape index: {}]
  %s1 = inlined_call_operand.hbm [shape: f32[256,64], index: 1, kind: input, shape index: {}]
  %s2 = inlined_call_operand.vmem [shape: f32[2,8,64], index: 2, kind: output, shape index: {}]
  %s3 = sld [smem:[#allocation0]]
  $region45: #{avg_pool_shortcut.1} parent=0
    _
  %s5 = ssub.s32 1, %s3
  %s6 = scalar_select 0, %s5, %s3
  $region1: #{avg_pool_shortcut.1} parent=0
    #allocation2 [shape = 'u8[131072]{0}', space=vmem, size = 0x20000, scoped, tag = 'input window, operand 1, single buffered']
    #allocation3 [shape = 's32[2]{0}', space=sflag, size = 0x8, scoped, tag = 'scoped memory for avg_pool_shortcut.1']
    %7 = vsyncpa [#allocation3], 0
    loop: start=0, step=1, limit=4
    $region2: #{avg_pool_shortcut.1} parent=1 // loop_pre_header
      _
    $region3: #{avg_pool_shortcut.1} parent=1 // loop_header
      %s9 = sphi 0, %s13
      %p10 = scmp.ge.s32.totalorder %s9, 4
      %s19 = sphi 0, %s21
      %s22 = sphi 0, %s19
      %s23 = sphi 0, %s22
      %s39 = sphi 0, %s23
      %s43 = sphi 0, %s43
      %s45 = sphi 0, %s43
      %s46 = sphi 0, %s45
      %s60 = sphi 0, %s46
      %s66 = sphi 0, %s68
      %s69 = sphi 0, %s66
      %s70 = sphi 0, %s69
      %s86 = sphi 0, %s70
    $region4: #{avg_pool_shortcut.1} parent=1 // loop_header_branch
      %12 = sbr.rel (%p10) target = $region8
    $region5: #{avg_pool_shortcut.1} parent=1 // loop_body
      %s14 = ssub.s32 %s9, 1
      %s15 = ssub.s32 %s9, 2
      %s16 = sadd.s32 %s9, 1
      %s17 = ssub.s32 %s9, %s16
      %p18 = scmp.eq.s32.totalorder %s17, 0
      %s20 = sadd.s32 %s19, 1
      %s21 = scalar_select %p18, %s19, %s20
      %p24 = pneg %p18
      %p25 = scmp.eq.s32.totalorder %s9, 1
      %p26 = por %p24, %p25
      %p27 = scmp.ne.s32.totalorder %s19, %s22
      %p28 = scmp.eq.s32.totalorder %s9, 0
      %p29 = por %p27, %p28
      %p30 = scmp.ne.s32.totalorder %s19, %s22
      %p31 = scmp.eq.s32.totalorder %s14, 1
      %p32 = por %p30, %p31
      %p33 = scmp.ne.s32.totalorder %s22, %s23
      %p34 = scmp.eq.s32.totalorder %s14, 0
      %p35 = por %p33, %p34
      %p36 = scmp.ne.s32.totalorder %s22, %s23
      %p37 = scmp.eq.s32.totalorder %s15, 1
      %p38 = por %p36, %p37
      %p40 = scmp.ne.s32.totalorder %s23, %s39
      %p41 = scmp.eq.s32.totalorder %s15, 0
      %p42 = por %p40, %p41
      %s44 = sadd.s32 %s43, 1
      %p47 = scmp.eq.s32.totalorder %s9, 1
      %p48 = scmp.ne.s32.totalorder %s43, %s45
      %p49 = scmp.eq.s32.totalorder %s9, 0
      %p50 = por %p48, %p49
      %p51 = scmp.ne.s32.totalorder %s43, %s45
      %p52 = scmp.eq.s32.totalorder %s14, 1
      %p53 = por %p51, %p52
      %p54 = scmp.ne.s32.totalorder %s45, %s46
      %p55 = scmp.eq.s32.totalorder %s14, 0
      %p56 = por %p54, %p55
      %p57 = scmp.ne.s32.totalorder %s45, %s46
      %p58 = scmp.eq.s32.totalorder %s15, 1
      %p59 = por %p57, %p58
      %p61 = scmp.ne.s32.totalorder %s46, %s60
      %p62 = scmp.eq.s32.totalorder %s15, 0
      %p63 = por %p61, %p62
      %s64 = ssub.s32 %s9, %s16
      %p65 = scmp.eq.s32.totalorder %s64, 0
      %s67 = sadd.s32 %s66, 1
      %s68 = scalar_select %p65, %s66, %s67
      %p71 = pneg %p65
      %p72 = scmp.eq.s32.totalorder %s9, 1
      %p73 = por %p71, %p72
      %p74 = scmp.ne.s32.totalorder %s66, %s69
      %p75 = scmp.eq.s32.totalorder %s9, 0
      %p76 = por %p74, %p75
      %p77 = scmp.ne.s32.totalorder %s66, %s69
      %p78 = scmp.eq.s32.totalorder %s14, 1
      %p79 = por %p77, %p78
      %p80 = scmp.ne.s32.totalorder %s69, %s70
      %p81 = scmp.eq.s32.totalorder %s14, 0
      %p82 = por %p80, %p81
      %p83 = scmp.ne.s32.totalorder %s69, %s70
      %p84 = scmp.eq.s32.totalorder %s15, 1
      %p85 = por %p83, %p84
      %p87 = scmp.ne.s32.totalorder %s70, %s86
      %p88 = scmp.eq.s32.totalorder %s15, 0
      %p89 = por %p87, %p88
      %p90 = scmp.le.s32.totalorder 1, %s9
      %p91 = scmp.lt.s32.totalorder %s9, 3
      %p92 = pnand %p90, %p91
      %p93 = pneg %p92
      // Predicated region
      $region9: #{avg_pool_shortcut.1} parent=5 // pred_check
        _
      $region10: #{avg_pool_shortcut.1} parent=5 // pred_check_branch
        %95 = sbr.rel (%p92) target = $region12
      $region11: #{avg_pool_shortcut.1} parent=5 // pred_region
        %s96 = ssub.s32 %s9, 1
        // Predicated region
        $region13: #{avg_pool_shortcut.1} parent=11 // pred_check
          %p97 = pneg %p56
        $region14: #{avg_pool_shortcut.1} parent=11 // pred_check_branch
          %99 = sbr.rel (%p97) target = $region16
        $region15: #{avg_pool_shortcut.1} parent=11 // pred_region
          %s101 = ssub.s32 4096, 4096
          %102 = vsyncadd [#allocation3], %s101
          %s103 = sshll.u32 [#allocation2], 4
          %s104 = int_to_ptr.vmem [resolvable:$true] %s103
          %109 = dma.hbm_to_vmem [thread:$0]  %s1, 4096, %s104, [#allocation3], 128, 128, 8
        $region16: #{avg_pool_shortcut.1} parent=11 // pred_fallthru
          _
      $region12: #{avg_pool_shortcut.1} parent=5 // pred_fallthru
        _
      %p110 = scmp.lt.s32.totalorder %s9, 2
      // Predicated region
      $region17: #{avg_pool_shortcut.1} parent=5 // pred_check
        %p111 = pneg %p110
      $region18: #{avg_pool_shortcut.1} parent=5 // pred_check_branch
        %113 = sbr.rel (%p111) target = $region20
      $region19: #{avg_pool_shortcut.1} parent=5 // pred_region
        // Predicated region
        $region21: #{avg_pool_shortcut.1} parent=19 // pred_check
          %p114 = pneg %p29
        $region22: #{avg_pool_shortcut.1} parent=19 // pred_check_branch
          %116 = sbr.rel (%p114) target = $region24
        $region23: #{avg_pool_shortcut.1} parent=19 // pred_region
          %p117 = scmp.lt.s32.totalorder %s9, 1
          %s118 = scalar_select %p117, %s9, 1
          %s119 = smul.addr %s118, 2
          %s120 = smul.addr %s119, 4
          %s121 = scalar_lea.vmem %s0, %s120
        $region24: #{avg_pool_shortcut.1} parent=19 // pred_fallthru
          _
      $region20: #{avg_pool_shortcut.1} parent=5 // pred_fallthru
        _
      %p122 = scmp.le.s32.totalorder 1, %s9
      %p123 = scmp.lt.s32.totalorder %s9, 3
      %p124 = pnand %p122, %p123
      %p125 = pneg %p124
      // Predicated region
      $region25: #{avg_pool_shortcut.1} parent=5 // pred_check
        _
      $region26: #{avg_pool_shortcut.1} parent=5 // pred_check_branch
        %127 = sbr.rel (%p124) target = $region28
      $region27: #{avg_pool_shortcut.1} parent=5 // pred_region
        %s128 = ssub.s32 %s9, 1
        // Predicated region
        $region29: #{avg_pool_shortcut.1} parent=27 // pred_check
          %p129 = pneg %p56
        $region30: #{avg_pool_shortcut.1} parent=27 // pred_check_branch
          %131 = sbr.rel (%p129) target = $region32
        $region31: #{avg_pool_shortcut.1} parent=27 // pred_region
          %132 = dma.done [#allocation3], 4096
        $region32: #{avg_pool_shortcut.1} parent=27 // pred_fallthru
          _
        %p133 = scmp.lt.s32.totalorder %s14, 1
        %s134 = scalar_select %p133, %s14, 1
        %s135 = smul.addr %s134, 2
        %s136 = smul.addr %s135, 4
        %s137 = scalar_lea.vmem %s0, %s136
        %p138 = pneg %p35
        %p139 = pneg %p32
        %p140 = pneg %p56
        %p141 = pneg %p53
        %p142 = pneg %p82
        %p143 = pneg %p79
        %p144 = scmp.lt.s32.totalorder %s14, 1
        %s145 = scalar_select %p144, %s14, 1
        %s146 = smul.addr %s145, 8
        %s147 = scalar_lea.vmem %s2, %s146
        %p148 = scmp.lt.s32.totalorder %s14, 1
        %s149 = scalar_select %p148, %s14, 1
        %s150 = smul.addr %s149, 2
        %s151 = smul.addr %s150, 4
        %s152 = scalar_lea.vmem %s0, %s151
        %p153 = scmp.lt.s32.totalorder %s14, 1
        %s154 = scalar_select %p153, %s14, 1
        %s155 = smul.addr %s154, 8
        %s156 = scalar_lea.vmem %s2, %s155
        %v157 = vld [vmem:[#allocation2] sm:$0xff]
        %v158 = vld [vmem:[#allocation2 + $0x8] sm:$0xff]
        %v159 = vld [vmem:[#allocation2 + $0x10] sm:$0xff]
        %v160 = vld [vmem:[#allocation2 + $0x18] sm:$0xff]
        %v161 = vld [vmem:[#allocation2 + $0x20] sm:$0xff]
        %v162 = vld [vmem:[#allocation2 + $0x28] sm:$0xff]
        %v163 = vld [vmem:[#allocation2 + $0x30] sm:$0xff]
        %v164 = vld [vmem:[#allocation2 + $0x38] sm:$0xff]
        %v165 = vld [vmem:[#allocation2 + $0x40] sm:$0xff]
        %v166 = vld [vmem:[#allocation2 + $0x48] sm:$0xff]
        %v167 = vld [vmem:[#allocation2 + $0x50] sm:$0xff]
        %v168 = vld [vmem:[#allocation2 + $0x58] sm:$0xff]
        %v169 = vld [vmem:[#allocation2 + $0x60] sm:$0xff]
        %v170 = vld [vmem:[#allocation2 + $0x68] sm:$0xff]
        %v171 = vld [vmem:[#allocation2 + $0x70] sm:$0xff]
        %v172 = vld [vmem:[#allocation2 + $0x78] sm:$0xff]
        %v173 = vld [vmem:[#allocation2 + $0x80] sm:$0xff]
        %v174 = vld [vmem:[#allocation2 + $0x88] sm:$0xff]
        %v175 = vld [vmem:[#allocation2 + $0x90] sm:$0xff]
        %v176 = vld [vmem:[#allocation2 + $0x98] sm:$0xff]
        %v177 = vld [vmem:[#allocation2 + $0xa0] sm:$0xff]
        %v178 = vld [vmem:[#allocation2 + $0xa8] sm:$0xff]
        %v179 = vld [vmem:[#allocation2 + $0xb0] sm:$0xff]
        %v180 = vld [vmem:[#allocation2 + $0xb8] sm:$0xff]
        %v181 = vld [vmem:[#allocation2 + $0xc0] sm:$0xff]
        %v182 = vld [vmem:[#allocation2 + $0xc8] sm:$0xff]
        %v183 = vld [vmem:[#allocation2 + $0xd0] sm:$0xff]
        %v184 = vld [vmem:[#allocation2 + $0xd8] sm:$0xff]
        %v185 = vld [vmem:[#allocation2 + $0xe0] sm:$0xff]
        %v186 = vld [vmem:[#allocation2 + $0xe8] sm:$0xff]
        %v187 = vld [vmem:[#allocation2 + $0xf0] sm:$0xff]
        %v188 = vld [vmem:[#allocation2 + $0xf8] sm:$0xff]
        %v189 = vld [vmem:[%s152] sm:$0xff]
        %v191 = vcombine.high %v189, %v189
        %193 = vmatprep.subr.mxu0 0.0
        %v194 = vand.u32 %v157, 4294901760
        %195 = vmatpush1.msra.mxu0 %v194
        %196 = vmatprep.subr.mxu0 0.0
        %v197 = vand.u32 %v158, 4294901760
        %198 = vmatpush1.msra.mxu0 %v197
        %199 = vmatprep.subr.mxu0 0.0
        %v200 = vand.u32 %v159, 4294901760
        %201 = vmatpush1.msra.mxu0 %v200
        %202 = vmatprep.subr.mxu0 0.0
        %v203 = vand.u32 %v160, 4294901760
        %204 = vmatpush1.msra.mxu0 %v203
        %205 = vmatprep.subr.mxu0 0.0
        %v206 = vand.u32 %v161, 4294901760
        %207 = vmatpush1.msra.mxu0 %v206
        %208 = vmatprep.subr.mxu0 0.0
        %v209 = vand.u32 %v162, 4294901760
        %210 = vmatpush1.msra.mxu0 %v209
        %211 = vmatprep.subr.mxu0 0.0
        %v212 = vand.u32 %v163, 4294901760
        %213 = vmatpush1.msra.mxu0 %v212
        %214 = vmatprep.subr.mxu0 0.0
        %v215 = vand.u32 %v164, 4294901760
        %216 = vmatpush1.msra.mxu0 %v215
        %217 = vmatprep.subr.mxu0 0.0
        %v218 = vand.u32 %v165, 4294901760
        %219 = vmatpush1.msra.mxu0 %v218
        %220 = vmatprep.subr.mxu0 0.0
        %v221 = vand.u32 %v166, 4294901760
        %222 = vmatpush1.msra.mxu0 %v221
        %223 = vmatprep.subr.mxu0 0.0
        %v224 = vand.u32 %v167, 4294901760
        %225 = vmatpush1.msra.mxu0 %v224
        %226 = vmatprep.subr.mxu0 0.0
        %v227 = vand.u32 %v168, 4294901760
        %228 = vmatpush1.msra.mxu0 %v227
        %229 = vmatprep.subr.mxu0 0.0
        %v230 = vand.u32 %v169, 4294901760
        %231 = vmatpush1.msra.mxu0 %v230
        %232 = vmatprep.subr.mxu0 0.0
        %v233 = vand.u32 %v170, 4294901760
        %234 = vmatpush1.msra.mxu0 %v233
        %235 = vmatprep.subr.mxu0 0.0
        %v236 = vand.u32 %v171, 4294901760
        %237 = vmatpush1.msra.mxu0 %v236
        %238 = vmatprep.subr.mxu0 0.0
        %v239 = vand.u32 %v172, 4294901760
        %240 = vmatpush1.msra.mxu0 %v239
        %241 = vmatprep.subr.mxu0 0.0
        %v242 = vand.u32 %v173, 4294901760
        %243 = vmatpush1.msra.mxu0 %v242
        %244 = vmatprep.subr.mxu0 0.0
        %v245 = vand.u32 %v174, 4294901760
        %246 = vmatpush1.msra.mxu0 %v245
        %247 = vmatprep.subr.mxu0 0.0
        %v248 = vand.u32 %v175, 4294901760
        %249 = vmatpush1.msra.mxu0 %v248
        %250 = vmatprep.subr.mxu0 0.0
        %v251 = vand.u32 %v176, 4294901760
        %252 = vmatpush1.msra.mxu0 %v251
        %253 = vmatprep.subr.mxu0 0.0
        %v254 = vand.u32 %v177, 4294901760
        %255 = vmatpush1.msra.mxu0 %v254
        %256 = vmatprep.subr.mxu0 0.0
        %v257 = vand.u32 %v178, 4294901760
        %258 = vmatpush1.msra.mxu0 %v257
        %259 = vmatprep.subr.mxu0 0.0
        %v260 = vand.u32 %v179, 4294901760
        %261 = vmatpush1.msra.mxu0 %v260
        %262 = vmatprep.subr.mxu0 0.0
        %v263 = vand.u32 %v180, 4294901760
        %264 = vmatpush1.msra.mxu0 %v263
        %265 = vmatprep.subr.mxu0 0.0
        %v266 = vand.u32 %v181, 4294901760
        %267 = vmatpush1.msra.mxu0 %v266
        %268 = vmatprep.subr.mxu0 0.0
        %v269 = vand.u32 %v182, 4294901760
        %270 = vmatpush1.msra.mxu0 %v269
        %271 = vmatprep.subr.mxu0 0.0
        %v272 = vand.u32 %v183, 4294901760
        %273 = vmatpush1.msra.mxu0 %v272
        %274 = vmatprep.subr.mxu0 0.0
        %v275 = vand.u32 %v184, 4294901760
        %276 = vmatpush1.msra.mxu0 %v275
        %277 = vmatprep.subr.mxu0 0.0
        %v278 = vand.u32 %v185, 4294901760
        %279 = vmatpush1.msra.mxu0 %v278
        %280 = vmatprep.subr.mxu0 0.0
        %v281 = vand.u32 %v186, 4294901760
        %282 = vmatpush1.msra.mxu0 %v281
        %283 = vmatprep.subr.mxu0 0.0
        %v284 = vand.u32 %v187, 4294901760
        %285 = vmatpush1.msra.mxu0 %v284
        %286 = vmatprep.subr.mxu0 0.0
        %v287 = vand.u32 %v188, 4294901760
        %288 = vmatpush1.msra.mxu0 %v287
        %v289 = vand.u32 %v191, 4294901760
        %v290 = vsub.f32 %v191, %v289
        %v291 = vand.u32 %v290, 4294901760
        %v292 = vsub.f32 %v290, %v291
        %v293 = vand.u32 %v292, 4294901760
        %294 = vmatprep.mubr.f32.mxu0 %v293
        %v295 = vand.u32 %v189, 4294901760
        %v296 = vsub.f32 %v189, %v295
        %v297 = vand.u32 %v296, 4294901760
        %v298 = vsub.f32 %v296, %v297
        %v299 = vand.u32 %v298, 4294901760
        %300 = vmatmul.mubr.f32.gmra.mrb[0].mxu0 %v299
        %v301 = vpop.f32.mrb[0].mxu0
        %v302 = vadd.f32 0.0, %v301
        %v303 = vpop.f32.mrb[0].mxu0
        %304 = vdwg.mxu0
        %305 = vmatprep.subr.mxu0 0.0
        %v306 = vand.u32 %v157, 4294901760
        %v307 = vsub.f32 %v157, %v306
        %v308 = vand.u32 %v307, 4294901760
        %v309 = vsub.f32 %v307, %v308
        %v310 = vand.u32 %v309, 4294901760
        %311 = vmatpush1.msra.mxu0 %v310
        %312 = vmatprep.subr.mxu0 0.0
        %v313 = vand.u32 %v158, 4294901760
        %v314 = vsub.f32 %v158, %v313
        %v315 = vand.u32 %v314, 4294901760
        %v316 = vsub.f32 %v314, %v315
        %v317 = vand.u32 %v316, 4294901760
        %318 = vmatpush1.msra.mxu0 %v317
        %319 = vmatprep.subr.mxu0 0.0
        %v320 = vand.u32 %v159, 4294901760
        %v321 = vsub.f32 %v159, %v320
        %v322 = vand.u32 %v321, 4294901760
        %v323 = vsub.f32 %v321, %v322
        %v324 = vand.u32 %v323, 4294901760
        %325 = vmatpush1.msra.mxu0 %v324
        %326 = vmatprep.subr.mxu0 0.0
        %v327 = vand.u32 %v160, 4294901760
        %v328 = vsub.f32 %v160, %v327
        %v329 = vand.u32 %v328, 4294901760
        %v330 = vsub.f32 %v328, %v329
        %v331 = vand.u32 %v330, 4294901760
        %332 = vmatpush1.msra.mxu0 %v331
        %333 = vmatprep.subr.mxu0 0.0
        %v334 = vand.u32 %v161, 4294901760
        %v335 = vsub.f32 %v161, %v334
        %v336 = vand.u32 %v335, 4294901760
        %v337 = vsub.f32 %v335, %v336
        %v338 = vand.u32 %v337, 4294901760
        %339 = vmatpush1.msra.mxu0 %v338
        %340 = vmatprep.subr.mxu0 0.0
        %v341 = vand.u32 %v162, 4294901760
        %v342 = vsub.f32 %v162, %v341
        %v343 = vand.u32 %v342, 4294901760
        %v344 = vsub.f32 %v342, %v343
        %v345 = vand.u32 %v344, 4294901760
        %346 = vmatpush1.msra.mxu0 %v345
        %347 = vmatprep.subr.mxu0 0.0
        %v348 = vand.u32 %v163, 4294901760
        %v349 = vsub.f32 %v163, %v348
        %v350 = vand.u32 %v349, 4294901760
        %v351 = vsub.f32 %v349, %v350
        %v352 = vand.u32 %v351, 4294901760
        %353 = vmatpush1.msra.mxu0 %v352
        %354 = vmatprep.subr.mxu0 0.0
        %v355 = vand.u32 %v164, 4294901760
        %v356 = vsub.f32 %v164, %v355
        %v357 = vand.u32 %v356, 4294901760
        %v358 = vsub.f32 %v356, %v357
        %v359 = vand.u32 %v358, 4294901760
        %360 = vmatpush1.msra.mxu0 %v359
        %361 = vmatprep.subr.mxu0 0.0
        %v362 = vand.u32 %v165, 4294901760
        %v363 = vsub.f32 %v165, %v362
        %v364 = vand.u32 %v363, 4294901760
        %v365 = vsub.f32 %v363, %v364
        %v366 = vand.u32 %v365, 4294901760
        %367 = vmatpush1.msra.mxu0 %v366
        %368 = vmatprep.subr.mxu0 0.0
        %v369 = vand.u32 %v166, 4294901760
        %v370 = vsub.f32 %v166, %v369
        %v371 = vand.u32 %v370, 4294901760
        %v372 = vsub.f32 %v370, %v371
        %v373 = vand.u32 %v372, 4294901760
        %374 = vmatpush1.msra.mxu0 %v373
        %375 = vmatprep.subr.mxu0 0.0
        %v376 = vand.u32 %v167, 4294901760
        %v377 = vsub.f32 %v167, %v376
        %v378 = vand.u32 %v377, 4294901760
        %v379 = vsub.f32 %v377, %v378
        %v380 = vand.u32 %v379, 4294901760
        %381 = vmatpush1.msra.mxu0 %v380
        %382 = vmatprep.subr.mxu0 0.0
        %v383 = vand.u32 %v168, 4294901760
        %v384 = vsub.f32 %v168, %v383
        %v385 = vand.u32 %v384, 4294901760
        %v386 = vsub.f32 %v384, %v385
        %v387 = vand.u32 %v386, 4294901760
        %388 = vmatpush1.msra.mxu0 %v387
        %389 = vmatprep.subr.mxu0 0.0
        %v390 = vand.u32 %v169, 4294901760
        %v391 = vsub.f32 %v169, %v390
        %v392 = vand.u32 %v391, 4294901760
        %v393 = vsub.f32 %v391, %v392
        %v394 = vand.u32 %v393, 4294901760
        %395 = vmatpush1.msra.mxu0 %v394
        %396 = vmatprep.subr.mxu0 0.0
        %v397 = vand.u32 %v170, 4294901760
        %v398 = vsub.f32 %v170, %v397
        %v399 = vand.u32 %v398, 4294901760
        %v400 = vsub.f32 %v398, %v399
        %v401 = vand.u32 %v400, 4294901760
        %402 = vmatpush1.msra.mxu0 %v401
        %403 = vmatprep.subr.mxu0 0.0
        %v404 = vand.u32 %v171, 4294901760
        %v405 = vsub.f32 %v171, %v404
        %v406 = vand.u32 %v405, 4294901760
        %v407 = vsub.f32 %v405, %v406
        %v408 = vand.u32 %v407, 4294901760
        %409 = vmatpush1.msra.mxu0 %v408
        %410 = vmatprep.subr.mxu0 0.0
        %v411 = vand.u32 %v172, 4294901760
        %v412 = vsub.f32 %v172, %v411
        %v413 = vand.u32 %v412, 4294901760
        %v414 = vsub.f32 %v412, %v413
        %v415 = vand.u32 %v414, 4294901760
        %416 = vmatpush1.msra.mxu0 %v415
        %417 = vmatprep.subr.mxu0 0.0
        %v418 = vand.u32 %v173, 4294901760
        %v419 = vsub.f32 %v173, %v418
        %v420 = vand.u32 %v419, 4294901760
        %v421 = vsub.f32 %v419, %v420
        %v422 = vand.u32 %v421, 4294901760
        %423 = vmatpush1.msra.mxu0 %v422
        %424 = vmatprep.subr.mxu0 0.0
        %v425 = vand.u32 %v174, 4294901760
        %v426 = vsub.f32 %v174, %v425
        %v427 = vand.u32 %v426, 4294901760
        %v428 = vsub.f32 %v426, %v427
        %v429 = vand.u32 %v428, 4294901760
        %430 = vmatpush1.msra.mxu0 %v429
        %431 = vmatprep.subr.mxu0 0.0
        %v432 = vand.u32 %v175, 4294901760
        %v433 = vsub.f32 %v175, %v432
        %v434 = vand.u32 %v433, 4294901760
        %v435 = vsub.f32 %v433, %v434
        %v436 = vand.u32 %v435, 4294901760
        %437 = vmatpush1.msra.mxu0 %v436
        %438 = vmatprep.subr.mxu0 0.0
        %v439 = vand.u32 %v176, 4294901760
        %v440 = vsub.f32 %v176, %v439
        %v441 = vand.u32 %v440, 4294901760
        %v442 = vsub.f32 %v440, %v441
        %v443 = vand.u32 %v442, 4294901760
        %444 = vmatpush1.msra.mxu0 %v443
        %445 = vmatprep.subr.mxu0 0.0
        %v446 = vand.u32 %v177, 4294901760
        %v447 = vsub.f32 %v177, %v446
        %v448 = vand.u32 %v447, 4294901760
        %v449 = vsub.f32 %v447, %v448
        %v450 = vand.u32 %v449, 4294901760
        %451 = vmatpush1.msra.mxu0 %v450
        %452 = vmatprep.subr.mxu0 0.0
        %v453 = vand.u32 %v178, 4294901760
        %v454 = vsub.f32 %v178, %v453
        %v455 = vand.u32 %v454, 4294901760
        %v456 = vsub.f32 %v454, %v455
        %v457 = vand.u32 %v456, 4294901760
        %458 = vmatpush1.msra.mxu0 %v457
        %459 = vmatprep.subr.mxu0 0.0
        %v460 = vand.u32 %v179, 4294901760
        %v461 = vsub.f32 %v179, %v460
        %v462 = vand.u32 %v461, 4294901760
        %v463 = vsub.f32 %v461, %v462
        %v464 = vand.u32 %v463, 4294901760
        %465 = vmatpush1.msra.mxu0 %v464
        %466 = vmatprep.subr.mxu0 0.0
        %v467 = vand.u32 %v180, 4294901760
        %v468 = vsub.f32 %v180, %v467
        %v469 = vand.u32 %v468, 4294901760
        %v470 = vsub.f32 %v468, %v469
        %v471 = vand.u32 %v470, 4294901760
        %472 = vmatpush1.msra.mxu0 %v471
        %473 = vmatprep.subr.mxu0 0.0
        %v474 = vand.u32 %v181, 4294901760
        %v475 = vsub.f32 %v181, %v474
        %v476 = vand.u32 %v475, 4294901760
        %v477 = vsub.f32 %v475, %v476
        %v478 = vand.u32 %v477, 4294901760
        %479 = vmatpush1.msra.mxu0 %v478
        %480 = vmatprep.subr.mxu0 0.0
        %v481 = vand.u32 %v182, 4294901760
        %v482 = vsub.f32 %v182, %v481
        %v483 = vand.u32 %v482, 4294901760
        %v484 = vsub.f32 %v482, %v483
        %v485 = vand.u32 %v484, 4294901760
        %486 = vmatpush1.msra.mxu0 %v485
        %487 = vmatprep.subr.mxu0 0.0
        %v488 = vand.u32 %v183, 4294901760
        %v489 = vsub.f32 %v183, %v488
        %v490 = vand.u32 %v489, 4294901760
        %v491 = vsub.f32 %v489, %v490
        %v492 = vand.u32 %v491, 4294901760
        %493 = vmatpush1.msra.mxu0 %v492
        %494 = vmatprep.subr.mxu0 0.0
        %v495 = vand.u32 %v184, 4294901760
        %v496 = vsub.f32 %v184, %v495
        %v497 = vand.u32 %v496, 4294901760
        %v498 = vsub.f32 %v496, %v497
        %v499 = vand.u32 %v498, 4294901760
        %500 = vmatpush1.msra.mxu0 %v499
        %501 = vmatprep.subr.mxu0 0.0
        %v502 = vand.u32 %v185, 4294901760
        %v503 = vsub.f32 %v185, %v502
        %v504 = vand.u32 %v503, 4294901760
        %v505 = vsub.f32 %v503, %v504
        %v506 = vand.u32 %v505, 4294901760
        %507 = vmatpush1.msra.mxu0 %v506
        %508 = vmatprep.subr.mxu0 0.0
        %v509 = vand.u32 %v186, 4294901760
        %v510 = vsub.f32 %v186, %v509
        %v511 = vand.u32 %v510, 4294901760
        %v512 = vsub.f32 %v510, %v511
        %v513 = vand.u32 %v512, 4294901760
        %514 = vmatpush1.msra.mxu0 %v513
        %515 = vmatprep.subr.mxu0 0.0
        %v516 = vand.u32 %v187, 4294901760
        %v517 = vsub.f32 %v187, %v516
        %v518 = vand.u32 %v517, 4294901760
        %v519 = vsub.f32 %v517, %v518
        %v520 = vand.u32 %v519, 4294901760
        %521 = vmatpush1.msra.mxu0 %v520
        %522 = vmatprep.subr.mxu0 0.0
        %v523 = vand.u32 %v188, 4294901760
        %v524 = vsub.f32 %v188, %v523
        %v525 = vand.u32 %v524, 4294901760
        %v526 = vsub.f32 %v524, %v525
        %v527 = vand.u32 %v526, 4294901760
        %528 = vmatpush1.msra.mxu0 %v527
        %v529 = vand.u32 %v191, 4294901760
        %530 = vmatprep.mubr.f32.mxu0 %v529
        %v531 = vand.u32 %v189, 4294901760
        %532 = vmatmul.mubr.f32.gmra.mrb[0].mxu0 %v531
        %v533 = vpop.f32.mrb[0].mxu0
        %v534 = vadd.f32 %v302, %v533
        %v535 = vpop.f32.mrb[0].mxu0
        %536 = vdwg.mxu0
        %537 = vmatprep.subr.mxu0 0.0
        %v538 = vand.u32 %v157, 4294901760
        %v539 = vsub.f32 %v157, %v538
        %540 = vmatpush1.msra.mxu0 %v539
        %541 = vmatprep.subr.mxu0 0.0
        %v542 = vand.u32 %v158, 4294901760
        %v543 = vsub.f32 %v158, %v542
        %544 = vmatpush1.msra.mxu0 %v543
        %545 = vmatprep.subr.mxu0 0.0
        %v546 = vand.u32 %v159, 4294901760
        %v547 = vsub.f32 %v159, %v546
        %548 = vmatpush1.msra.mxu0 %v547
        %549 = vmatprep.subr.mxu0 0.0
        %v550 = vand.u32 %v160, 4294901760
        %v551 = vsub.f32 %v160, %v550
        %552 = vmatpush1.msra.mxu0 %v551
        %553 = vmatprep.subr.mxu0 0.0
        %v554 = vand.u32 %v161, 4294901760
        %v555 = vsub.f32 %v161, %v554
        %556 = vmatpush1.msra.mxu0 %v555
        %557 = vmatprep.subr.mxu0 0.0
        %v558 = vand.u32 %v162, 4294901760
        %v559 = vsub.f32 %v162, %v558
        %560 = vmatpush1.msra.mxu0 %v559
        %561 = vmatprep.subr.mxu0 0.0
        %v562 = vand.u32 %v163, 4294901760
        %v563 = vsub.f32 %v163, %v562
        %564 = vmatpush1.msra.mxu0 %v563
        %565 = vmatprep.subr.mxu0 0.0
        %v566 = vand.u32 %v164, 4294901760
        %v567 = vsub.f32 %v164, %v566
        %568 = vmatpush1.msra.mxu0 %v567
        %569 = vmatprep.subr.mxu0 0.0
        %v570 = vand.u32 %v165, 4294901760
        %v571 = vsub.f32 %v165, %v570
        %572 = vmatpush1.msra.mxu0 %v571
        %573 = vmatprep.subr.mxu0 0.0
        %v574 = vand.u32 %v166, 4294901760
        %v575 = vsub.f32 %v166, %v574
        %576 = vmatpush1.msra.mxu0 %v575
        %577 = vmatprep.subr.mxu0 0.0
        %v578 = vand.u32 %v167, 4294901760
        %v579 = vsub.f32 %v167, %v578
        %580 = vmatpush1.msra.mxu0 %v579
        %581 = vmatprep.subr.mxu0 0.0
        %v582 = vand.u32 %v168, 4294901760
        %v583 = vsub.f32 %v168, %v582
        %584 = vmatpush1.msra.mxu0 %v583
        %585 = vmatprep.subr.mxu0 0.0
        %v586 = vand.u32 %v169, 4294901760
        %v587 = vsub.f32 %v169, %v586
        %588 = vmatpush1.msra.mxu0 %v587
        %589 = vmatprep.subr.mxu0 0.0
        %v590 = vand.u32 %v170, 4294901760
        %v591 = vsub.f32 %v170, %v590
        %592 = vmatpush1.msra.mxu0 %v591
        %593 = vmatprep.subr.mxu0 0.0
        %v594 = vand.u32 %v171, 4294901760
        %v595 = vsub.f32 %v171, %v594
        %596 = vmatpush1.msra.mxu0 %v595
        %597 = vmatprep.subr.mxu0 0.0
        %v598 = vand.u32 %v172, 4294901760
        %v599 = vsub.f32 %v172, %v598
        %600 = vmatpush1.msra.mxu0 %v599
        %601 = vmatprep.subr.mxu0 0.0
        %v602 = vand.u32 %v173, 4294901760
        %v603 = vsub.f32 %v173, %v602
        %604 = vmatpush1.msra.mxu0 %v603
        %605 = vmatprep.subr.mxu0 0.0
        %v606 = vand.u32 %v174, 4294901760
        %v607 = vsub.f32 %v174, %v606
        %608 = vmatpush1.msra.mxu0 %v607
        %609 = vmatprep.subr.mxu0 0.0
        %v610 = vand.u32 %v175, 4294901760
        %v611 = vsub.f32 %v175, %v610
        %612 = vmatpush1.msra.mxu0 %v611
        %613 = vmatprep.subr.mxu0 0.0
        %v614 = vand.u32 %v176, 4294901760
        %v615 = vsub.f32 %v176, %v614
        %616 = vmatpush1.msra.mxu0 %v615
        %617 = vmatprep.subr.mxu0 0.0
        %v618 = vand.u32 %v177, 4294901760
        %v619 = vsub.f32 %v177, %v618
        %620 = vmatpush1.msra.mxu0 %v619
        %621 = vmatprep.subr.mxu0 0.0
        %v622 = vand.u32 %v178, 4294901760
        %v623 = vsub.f32 %v178, %v622
        %624 = vmatpush1.msra.mxu0 %v623
        %625 = vmatprep.subr.mxu0 0.0
        %v626 = vand.u32 %v179, 4294901760
        %v627 = vsub.f32 %v179, %v626
        %628 = vmatpush1.msra.mxu0 %v627
        %629 = vmatprep.subr.mxu0 0.0
        %v630 = vand.u32 %v180, 4294901760
        %v631 = vsub.f32 %v180, %v630
        %632 = vmatpush1.msra.mxu0 %v631
        %633 = vmatprep.subr.mxu0 0.0
        %v634 = vand.u32 %v181, 4294901760
        %v635 = vsub.f32 %v181, %v634
        %636 = vmatpush1.msra.mxu0 %v635
        %637 = vmatprep.subr.mxu0 0.0
        %v638 = vand.u32 %v182, 4294901760
        %v639 = vsub.f32 %v182, %v638
        %640 = vmatpush1.msra.mxu0 %v639
        %641 = vmatprep.subr.mxu0 0.0
        %v642 = vand.u32 %v183, 4294901760
        %v643 = vsub.f32 %v183, %v642
        %644 = vmatpush1.msra.mxu0 %v643
        %645 = vmatprep.subr.mxu0 0.0
        %v646 = vand.u32 %v184, 4294901760
        %v647 = vsub.f32 %v184, %v646
        %648 = vmatpush1.msra.mxu0 %v647
        %649 = vmatprep.subr.mxu0 0.0
        %v650 = vand.u32 %v185, 4294901760
        %v651 = vsub.f32 %v185, %v650
        %652 = vmatpush1.msra.mxu0 %v651
        %653 = vmatprep.subr.mxu0 0.0
        %v654 = vand.u32 %v186, 4294901760
        %v655 = vsub.f32 %v186, %v654
        %656 = vmatpush1.msra.mxu0 %v655
        %657 = vmatprep.subr.mxu0 0.0
        %v658 = vand.u32 %v187, 4294901760
        %v659 = vsub.f32 %v187, %v658
        %660 = vmatpush1.msra.mxu0 %v659
        %661 = vmatprep.subr.mxu0 0.0
        %v662 = vand.u32 %v188, 4294901760
        %v663 = vsub.f32 %v188, %v662
        %664 = vmatpush1.msra.mxu0 %v663
        %v665 = vand.u32 %v191, 4294901760
        %v666 = vsub.f32 %v191, %v665
        %667 = vmatprep.mubr.f32.mxu0 %v666
        %v668 = vand.u32 %v189, 4294901760
        %v669 = vsub.f32 %v189, %v668
        %670 = vmatmul.mubr.f32.gmra.mrb[0].mxu0 %v669
        %v671 = vpop.f32.mrb[0].mxu0
        %v672 = vadd.f32 %v534, %v671
        %v673 = vpop.f32.mrb[0].mxu0
        %674 = vdwg.mxu0
        %675 = vmatprep.subr.mxu0 0.0
        %v676 = vand.u32 %v157, 4294901760
        %677 = vmatpush1.msra.mxu0 %v676
        %678 = vmatprep.subr.mxu0 0.0
        %v679 = vand.u32 %v158, 4294901760
        %680 = vmatpush1.msra.mxu0 %v679
        %681 = vmatprep.subr.mxu0 0.0
        %v682 = vand.u32 %v159, 4294901760
        %683 = vmatpush1.msra.mxu0 %v682
        %684 = vmatprep.subr.mxu0 0.0
        %v685 = vand.u32 %v160, 4294901760
        %686 = vmatpush1.msra.mxu0 %v685
        %687 = vmatprep.subr.mxu0 0.0
        %v688 = vand.u32 %v161, 4294901760
        %689 = vmatpush1.msra.mxu0 %v688
        %690 = vmatprep.subr.mxu0 0.0
        %v691 = vand.u32 %v162, 4294901760
        %692 = vmatpush1.msra.mxu0 %v691
        %693 = vmatprep.subr.mxu0 0.0
        %v694 = vand.u32 %v163, 4294901760
        %695 = vmatpush1.msra.mxu0 %v694
        %696 = vmatprep.subr.mxu0 0.0
        %v697 = vand.u32 %v164, 4294901760
        %698 = vmatpush1.msra.mxu0 %v697
        %699 = vmatprep.subr.mxu0 0.0
        %v700 = vand.u32 %v165, 4294901760
        %701 = vmatpush1.msra.mxu0 %v700
        %702 = vmatprep.subr.mxu0 0.0
        %v703 = vand.u32 %v166, 4294901760
        %704 = vmatpush1.msra.mxu0 %v703
        %705 = vmatprep.subr.mxu0 0.0
        %v706 = vand.u32 %v167, 4294901760
        %707 = vmatpush1.msra.mxu0 %v706
        %708 = vmatprep.subr.mxu0 0.0
        %v709 = vand.u32 %v168, 4294901760
        %710 = vmatpush1.msra.mxu0 %v709
        %711 = vmatprep.subr.mxu0 0.0
        %v712 = vand.u32 %v169, 4294901760
        %713 = vmatpush1.msra.mxu0 %v712
        %714 = vmatprep.subr.mxu0 0.0
        %v715 = vand.u32 %v170, 4294901760
        %716 = vmatpush1.msra.mxu0 %v715
        %717 = vmatprep.subr.mxu0 0.0
        %v718 = vand.u32 %v171, 4294901760
        %719 = vmatpush1.msra.mxu0 %v718
        %720 = vmatprep.subr.mxu0 0.0
        %v721 = vand.u32 %v172, 4294901760
        %722 = vmatpush1.msra.mxu0 %v721
        %723 = vmatprep.subr.mxu0 0.0
        %v724 = vand.u32 %v173, 4294901760
        %725 = vmatpush1.msra.mxu0 %v724
        %726 = vmatprep.subr.mxu0 0.0
        %v727 = vand.u32 %v174, 4294901760
        %728 = vmatpush1.msra.mxu0 %v727
        %729 = vmatprep.subr.mxu0 0.0
        %v730 = vand.u32 %v175, 4294901760
        %731 = vmatpush1.msra.mxu0 %v730
        %732 = vmatprep.subr.mxu0 0.0
        %v733 = vand.u32 %v176, 4294901760
        %734 = vmatpush1.msra.mxu0 %v733
        %735 = vmatprep.subr.mxu0 0.0
        %v736 = vand.u32 %v177, 4294901760
        %737 = vmatpush1.msra.mxu0 %v736
        %738 = vmatprep.subr.mxu0 0.0
        %v739 = vand.u32 %v178, 4294901760
        %740 = vmatpush1.msra.mxu0 %v739
        %741 = vmatprep.subr.mxu0 0.0
        %v742 = vand.u32 %v179, 4294901760
        %743 = vmatpush1.msra.mxu0 %v742
        %744 = vmatprep.subr.mxu0 0.0
        %v745 = vand.u32 %v180, 4294901760
        %746 = vmatpush1.msra.mxu0 %v745
        %747 = vmatprep.subr.mxu0 0.0
        %v748 = vand.u32 %v181, 4294901760
        %749 = vmatpush1.msra.mxu0 %v748
        %750 = vmatprep.subr.mxu0 0.0
        %v751 = vand.u32 %v182, 4294901760
        %752 = vmatpush1.msra.mxu0 %v751
        %753 = vmatprep.subr.mxu0 0.0
        %v754 = vand.u32 %v183, 4294901760
        %755 = vmatpush1.msra.mxu0 %v754
        %756 = vmatprep.subr.mxu0 0.0
        %v757 = vand.u32 %v184, 4294901760
        %758 = vmatpush1.msra.mxu0 %v757
        %759 = vmatprep.subr.mxu0 0.0
        %v760 = vand.u32 %v185, 4294901760
        %761 = vmatpush1.msra.mxu0 %v760
        %762 = vmatprep.subr.mxu0 0.0
        %v763 = vand.u32 %v186, 4294901760
        %764 = vmatpush1.msra.mxu0 %v763
        %765 = vmatprep.subr.mxu0 0.0
        %v766 = vand.u32 %v187, 4294901760
        %767 = vmatpush1.msra.mxu0 %v766
        %768 = vmatprep.subr.mxu0 0.0
        %v769 = vand.u32 %v188, 4294901760
        %770 = vmatpush1.msra.mxu0 %v769
        %v771 = vand.u32 %v191, 4294901760
        %v772 = vsub.f32 %v191, %v771
        %v773 = vand.u32 %v772, 4294901760
        %774 = vmatprep.mubr.f32.mxu0 %v773
        %v775 = vand.u32 %v189, 4294901760
        %v776 = vsub.f32 %v189, %v775
        %v777 = vand.u32 %v776, 4294901760
        %778 = vmatmul.mubr.f32.gmra.mrb[0].mxu0 %v777
        %v779 = vpop.f32.mrb[0].mxu0
        %v780 = vadd.f32 %v672, %v779
        %v781 = vpop.f32.mrb[0].mxu0
        %782 = vdwg.mxu0
        %783 = vmatprep.subr.mxu0 0.0
        %v784 = vand.u32 %v157, 4294901760
        %v785 = vsub.f32 %v157, %v784
        %v786 = vand.u32 %v785, 4294901760
        %787 = vmatpush1.msra.mxu0 %v786
        %788 = vmatprep.subr.mxu0 0.0
        %v789 = vand.u32 %v158, 4294901760
        %v790 = vsub.f32 %v158, %v789
        %v791 = vand.u32 %v790, 4294901760
        %792 = vmatpush1.msra.mxu0 %v791
        %793 = vmatprep.subr.mxu0 0.0
        %v794 = vand.u32 %v159, 4294901760
        %v795 = vsub.f32 %v159, %v794
        %v796 = vand.u32 %v795, 4294901760
        %797 = vmatpush1.msra.mxu0 %v796
        %798 = vmatprep.subr.mxu0 0.0
        %v799 = vand.u32 %v160, 4294901760
        %v800 = vsub.f32 %v160, %v799
        %v801 = vand.u32 %v800, 4294901760
        %802 = vmatpush1.msra.mxu0 %v801
        %803 = vmatprep.subr.mxu0 0.0
        %v804 = vand.u32 %v161, 4294901760
        %v805 = vsub.f32 %v161, %v804
        %v806 = vand.u32 %v805, 4294901760
        %807 = vmatpush1.msra.mxu0 %v806
        %808 = vmatprep.subr.mxu0 0.0
        %v809 = vand.u32 %v162, 4294901760
        %v810 = vsub.f32 %v162, %v809
        %v811 = vand.u32 %v810, 4294901760
        %812 = vmatpush1.msra.mxu0 %v811
        %813 = vmatprep.subr.mxu0 0.0
        %v814 = vand.u32 %v163, 4294901760
        %v815 = vsub.f32 %v163, %v814
        %v816 = vand.u32 %v815, 4294901760
        %817 = vmatpush1.msra.mxu0 %v816
        %818 = vmatprep.subr.mxu0 0.0
        %v819 = vand.u32 %v164, 4294901760
        %v820 = vsub.f32 %v164, %v819
        %v821 = vand.u32 %v820, 4294901760
        %822 = vmatpush1.msra.mxu0 %v821
        %823 = vmatprep.subr.mxu0 0.0
        %v824 = vand.u32 %v165, 4294901760
        %v825 = vsub.f32 %v165, %v824
        %v826 = vand.u32 %v825, 4294901760
        %827 = vmatpush1.msra.mxu0 %v826
        %828 = vmatprep.subr.mxu0 0.0
        %v829 = vand.u32 %v166, 4294901760
        %v830 = vsub.f32 %v166, %v829
        %v831 = vand.u32 %v830, 4294901760
        %832 = vmatpush1.msra.mxu0 %v831
        %833 = vmatprep.subr.mxu0 0.0
        %v834 = vand.u32 %v167, 4294901760
        %v835 = vsub.f32 %v167, %v834
        %v836 = vand.u32 %v835, 4294901760
        %837 = vmatpush1.msra.mxu0 %v836
        %838 = vmatprep.subr.mxu0 0.0
        %v839 = vand.u32 %v168, 4294901760
        %v840 = vsub.f32 %v168, %v839
        %v841 = vand.u32 %v840, 4294901760
        %842 = vmatpush1.msra.mxu0 %v841
        %843 = vmatprep.subr.mxu0 0.0
        %v844 = vand.u32 %v169, 4294901760
        %v845 = vsub.f32 %v169, %v844
        %v846 = vand.u32 %v845, 4294901760
        %847 = vmatpush1.msra.mxu0 %v846
        %848 = vmatprep.subr.mxu0 0.0
        %v849 = vand.u32 %v170, 4294901760
        %v850 = vsub.f32 %v170, %v849
        %v851 = vand.u32 %v850, 4294901760
        %852 = vmatpush1.msra.mxu0 %v851
        %853 = vmatprep.subr.mxu0 0.0
        %v854 = vand.u32 %v171, 4294901760
        %v855 = vsub.f32 %v171, %v854
        %v856 = vand.u32 %v855, 4294901760
        %857 = vmatpush1.msra.mxu0 %v856
        %858 = vmatprep.subr.mxu0 0.0
        %v859 = vand.u32 %v172, 4294901760
        %v860 = vsub.f32 %v172, %v859
        %v861 = vand.u32 %v860, 4294901760
        %862 = vmatpush1.msra.mxu0 %v861
        %863 = vmatprep.subr.mxu0 0.0
        %v864 = vand.u32 %v173, 4294901760
        %v865 = vsub.f32 %v173, %v864
        %v866 = vand.u32 %v865, 4294901760
        %867 = vmatpush1.msra.mxu0 %v866
        %868 = vmatprep.subr.mxu0 0.0
        %v869 = vand.u32 %v174, 4294901760
        %v870 = vsub.f32 %v174, %v869
        %v871 = vand.u32 %v870, 4294901760
        %872 = vmatpush1.msra.mxu0 %v871
        %873 = vmatprep.subr.mxu0 0.0
        %v874 = vand.u32 %v175, 4294901760
        %v875 = vsub.f32 %v175, %v874
        %v876 = vand.u32 %v875, 4294901760
        %877 = vmatpush1.msra.mxu0 %v876
        %878 = vmatprep.subr.mxu0 0.0
        %v879 = vand.u32 %v176, 4294901760
        %v880 = vsub.f32 %v176, %v879
        %v881 = vand.u32 %v880, 4294901760
        %882 = vmatpush1.msra.mxu0 %v881
        %883 = vmatprep.subr.mxu0 0.0
        %v884 = vand.u32 %v177, 4294901760
        %v885 = vsub.f32 %v177, %v884
        %v886 = vand.u32 %v885, 4294901760
        %887 = vmatpush1.msra.mxu0 %v886
        %888 = vmatprep.subr.mxu0 0.0
        %v889 = vand.u32 %v178, 4294901760
        %v890 = vsub.f32 %v178, %v889
        %v891 = vand.u32 %v890, 4294901760
        %892 = vmatpush1.msra.mxu0 %v891
        %893 = vmatprep.subr.mxu0 0.0
        %v894 = vand.u32 %v179, 4294901760
        %v895 = vsub.f32 %v179, %v894
        %v896 = vand.u32 %v895, 4294901760
        %897 = vmatpush1.msra.mxu0 %v896
        %898 = vmatprep.subr.mxu0 0.0
        %v899 = vand.u32 %v180, 4294901760
        %v900 = vsub.f32 %v180, %v899
        %v901 = vand.u32 %v900, 4294901760
        %902 = vmatpush1.msra.mxu0 %v901
        %903 = vmatprep.subr.mxu0 0.0
        %v904 = vand.u32 %v181, 4294901760
        %v905 = vsub.f32 %v181, %v904
        %v906 = vand.u32 %v905, 4294901760
        %907 = vmatpush1.msra.mxu0 %v906
        %908 = vmatprep.subr.mxu0 0.0
        %v909 = vand.u32 %v182, 4294901760
        %v910 = vsub.f32 %v182, %v909
        %v911 = vand.u32 %v910, 4294901760
        %912 = vmatpush1.msra.mxu0 %v911
        %913 = vmatprep.subr.mxu0 0.0
        %v914 = vand.u32 %v183, 4294901760
        %v915 = vsub.f32 %v183, %v914
        %v916 = vand.u32 %v915, 4294901760
        %917 = vmatpush1.msra.mxu0 %v916
        %918 = vmatprep.subr.mxu0 0.0
        %v919 = vand.u32 %v184, 4294901760
        %v920 = vsub.f32 %v184, %v919
        %v921 = vand.u32 %v920, 4294901760
        %922 = vmatpush1.msra.mxu0 %v921
        %923 = vmatprep.subr.mxu0 0.0
        %v924 = vand.u32 %v185, 4294901760
        %v925 = vsub.f32 %v185, %v924
        %v926 = vand.u32 %v925, 4294901760
        %927 = vmatpush1.msra.mxu0 %v926
        %928 = vmatprep.subr.mxu0 0.0
        %v929 = vand.u32 %v186, 4294901760
        %v930 = vsub.f32 %v186, %v929
        %v931 = vand.u32 %v930, 4294901760
        %932 = vmatpush1.msra.mxu0 %v931
        %933 = vmatprep.subr.mxu0 0.0
        %v934 = vand.u32 %v187, 4294901760
        %v935 = vsub.f32 %v187, %v934
        %v936 = vand.u32 %v935, 4294901760
        %937 = vmatpush1.msra.mxu0 %v936
        %938 = vmatprep.subr.mxu0 0.0
        %v939 = vand.u32 %v188, 4294901760
        %v940 = vsub.f32 %v188, %v939
        %v941 = vand.u32 %v940, 4294901760
        %942 = vmatpush1.msra.mxu0 %v941
        %v943 = vand.u32 %v191, 4294901760
        %944 = vmatprep.mubr.f32.mxu0 %v943
        %v945 = vand.u32 %v189, 4294901760
        %946 = vmatmul.mubr.f32.gmra.mrb[0].mxu0 %v945
        %v947 = vpop.f32.mrb[0].mxu0
        %v948 = vadd.f32 %v780, %v947
        %v949 = vpop.f32.mrb[0].mxu0
        %950 = vdwg.mxu0
        %951 = vmatprep.subr.mxu0 0.0
        %v952 = vand.u32 %v157, 4294901760
        %953 = vmatpush1.msra.mxu0 %v952
        %954 = vmatprep.subr.mxu0 0.0
        %v955 = vand.u32 %v158, 4294901760
        %956 = vmatpush1.msra.mxu0 %v955
        %957 = vmatprep.subr.mxu0 0.0
        %v958 = vand.u32 %v159, 4294901760
        %959 = vmatpush1.msra.mxu0 %v958
        %960 = vmatprep.subr.mxu0 0.0
        %v961 = vand.u32 %v160, 4294901760
        %962 = vmatpush1.msra.mxu0 %v961
        %963 = vmatprep.subr.mxu0 0.0
        %v964 = vand.u32 %v161, 4294901760
        %965 = vmatpush1.msra.mxu0 %v964
        %966 = vmatprep.subr.mxu0 0.0
        %v967 = vand.u32 %v162, 4294901760
        %968 = vmatpush1.msra.mxu0 %v967
        %969 = vmatprep.subr.mxu0 0.0
        %v970 = vand.u32 %v163, 4294901760
        %971 = vmatpush1.msra.mxu0 %v970
        %972 = vmatprep.subr.mxu0 0.0
        %v973 = vand.u32 %v164, 4294901760
        %974 = vmatpush1.msra.mxu0 %v973
        %975 = vmatprep.subr.mxu0 0.0
        %v976 = vand.u32 %v165, 4294901760
        %977 = vmatpush1.msra.mxu0 %v976
        %978 = vmatprep.subr.mxu0 0.0
        %v979 = vand.u32 %v166, 4294901760
        %980 = vmatpush1.msra.mxu0 %v979
        %981 = vmatprep.subr.mxu0 0.0
        %v982 = vand.u32 %v167, 4294901760
        %983 = vmatpush1.msra.mxu0 %v982
        %984 = vmatprep.subr.mxu0 0.0
        %v985 = vand.u32 %v168, 4294901760
        %986 = vmatpush1.msra.mxu0 %v985
        %987 = vmatprep.subr.mxu0 0.0
        %v988 = vand.u32 %v169, 4294901760
        %989 = vmatpush1.msra.mxu0 %v988
        %990 = vmatprep.subr.mxu0 0.0
        %v991 = vand.u32 %v170, 4294901760
        %992 = vmatpush1.msra.mxu0 %v991
        %993 = vmatprep.subr.mxu0 0.0
        %v994 = vand.u32 %v171, 4294901760
        %995 = vmatpush1.msra.mxu0 %v994
        %996 = vmatprep.subr.mxu0 0.0
        %v997 = vand.u32 %v172, 4294901760
        %998 = vmatpush1.msra.mxu0 %v997
        %999 = vmatprep.subr.mxu0 0.0
        %v1000 = vand.u32 %v173, 4294901760
        %1001 = vmatpush1.msra.mxu0 %v1000
        %1002 = vmatprep.subr.mxu0 0.0
        %v1003 = vand.u32 %v174, 4294901760
        %1004 = vmatpush1.msra.mxu0 %v1003
        %1005 = vmatprep.subr.mxu0 0.0
        %v1006 = vand.u32 %v175, 4294901760
        %1007 = vmatpush1.msra.mxu0 %v1006
        %1008 = vmatprep.subr.mxu0 0.0
        %v1009 = vand.u32 %v176, 4294901760
        %1010 = vmatpush1.msra.mxu0 %v1009
        %1011 = vmatprep.subr.mxu0 0.0
        %v1012 = vand.u32 %v177, 4294901760
        %1013 = vmatpush1.msra.mxu0 %v1012
        %1014 = vmatprep.subr.mxu0 0.0
        %v1015 = vand.u32 %v178, 4294901760
        %1016 = vmatpush1.msra.mxu0 %v1015
        %1017 = vmatprep.subr.mxu0 0.0
        %v1018 = vand.u32 %v179, 4294901760
        %1019 = vmatpush1.msra.mxu0 %v1018
        %1020 = vmatprep.subr.mxu0 0.0
        %v1021 = vand.u32 %v180, 4294901760
        %1022 = vmatpush1.msra.mxu0 %v1021
        %1023 = vmatprep.subr.mxu0 0.0
        %v1024 = vand.u32 %v181, 4294901760
        %1025 = vmatpush1.msra.mxu0 %v1024
        %1026 = vmatprep.subr.mxu0 0.0
        %v1027 = vand.u32 %v182, 4294901760
        %1028 = vmatpush1.msra.mxu0 %v1027
        %1029 = vmatprep.subr.mxu0 0.0
        %v1030 = vand.u32 %v183, 4294901760
        %1031 = vmatpush1.msra.mxu0 %v1030
        %1032 = vmatprep.subr.mxu0 0.0
        %v1033 = vand.u32 %v184, 4294901760
        %1034 = vmatpush1.msra.mxu0 %v1033
        %1035 = vmatprep.subr.mxu0 0.0
        %v1036 = vand.u32 %v185, 4294901760
        %1037 = vmatpush1.msra.mxu0 %v1036
        %1038 = vmatprep.subr.mxu0 0.0
        %v1039 = vand.u32 %v186, 4294901760
        %1040 = vmatpush1.msra.mxu0 %v1039
        %1041 = vmatprep.subr.mxu0 0.0
        %v1042 = vand.u32 %v187, 4294901760
        %1043 = vmatpush1.msra.mxu0 %v1042
        %1044 = vmatprep.subr.mxu0 0.0
        %v1045 = vand.u32 %v188, 4294901760
        %1046 = vmatpush1.msra.mxu0 %v1045
        %v1047 = vand.u32 %v191, 4294901760
        %1048 = vmatprep.mubr.f32.mxu0 %v1047
        %v1049 = vand.u32 %v189, 4294901760
        %1050 = vmatmul.mubr.f32.gmra.mrb[0].mxu0 %v1049
        %v1051 = vpop.f32.mrb[0].mxu0
        %v1052 = vadd.f32 %v948, %v1051
        %v1053 = vpop.f32.mrb[0].mxu0
        %1054 = vdwg.mxu0
        %vm1055 = vcmask 519168
        %1056 = vst.msk [vmem:[%s156] sm:$0xf] %vm1055, %v1052
        %1057 = vst.msk [vmem:[%s156 + $0x4] sm:$0xf] %vm1055, 0.0
        %p1058 = scmp.lt.s32.totalorder %s14, 1
        %s1059 = scalar_select %p1058, %s14, 1
        %s1060 = smul.addr %s1059, 8
        %s1061 = scalar_lea.vmem %s2, %s1060
        // Predicated region
        $region33: #{avg_pool_shortcut.1} parent=27 // pred_check
          %p1062 = pneg %p79
        $region34: #{avg_pool_shortcut.1} parent=27 // pred_check_branch
          %1064 = sbr.rel (%p1062) target = $region36
        $region35: #{avg_pool_shortcut.1} parent=27 // pred_region
          _
        $region36: #{avg_pool_shortcut.1} parent=27 // pred_fallthru
          _
      $region28: #{avg_pool_shortcut.1} parent=5 // pred_fallthru
        _
      %p1065 = scmp.le.s32.totalorder 2, %s9
      // Predicated region
      $region37: #{avg_pool_shortcut.1} parent=5 // pred_check
        %p1066 = pneg %p1065
      $region38: #{avg_pool_shortcut.1} parent=5 // pred_check_branch
        %1068 = sbr.rel (%p1066) target = $region40
      $region39: #{avg_pool_shortcut.1} parent=5 // pred_region
        %s1069 = ssub.s32 %s9, 2
        // Predicated region
        $region41: #{avg_pool_shortcut.1} parent=39 // pred_check
          %p1070 = pneg %p85
        $region42: #{avg_pool_shortcut.1} parent=39 // pred_check_branch
          %1072 = sbr.rel (%p1070) target = $region44
        $region43: #{avg_pool_shortcut.1} parent=39 // pred_region
          %p1073 = scmp.lt.s32.totalorder %s15, 1
          %s1074 = scalar_select %p1073, %s15, 1
          %s1075 = smul.addr %s1074, 8
          %s1076 = scalar_lea.vmem %s2, %s1075
        $region44: #{avg_pool_shortcut.1} parent=39 // pred_fallthru
          _
      $region40: #{avg_pool_shortcut.1} parent=5 // pred_fallthru
        _
    $region6: #{avg_pool_shortcut.1} parent=1 // loop_footer
      %s13 = sadd.s32 1, %s9
    $region7: #{avg_pool_shortcut.1} parent=1 // loop_footer_branch
      %8 = sbr.rel target = $region3
    $region8: #{avg_pool_shortcut.1} parent=1 // loop_exit
      _
    %1077 = vsyncpa [#allocation3], 1
    %s1078 = scalar_lea.sflag [#allocation3], 1
    %1079 = vsyncpa %s1078, 1

</llo_original>
